<compile_context>
chip_gen: v7x
topology: tpu7x:2x2x1
jax: 0.10.0
libtpu: 0.0.40
codegen_flags: <defaults>
</compile_context>

<pallas_src>
import functools

import jax
import jax.numpy as jnp
from jax.experimental import pallas as pl
from jax.experimental.pallas import tpu as pltpu


def _conv1x1_kernel(x_ref, w_ref, b_ref, o_ref, *, cin, cout, use_vpu):
    # x_ref: (1, Cin, TM)   w_ref: (Cout, Cin)   b_ref: (Cout, 1)   o_ref: (1, Cout, TM)
    x = x_ref[0]            # (Cin, TM)  -- pixels are the lane (fast) axis
    w = w_ref[...]          # (Cout, Cin)
    b = b_ref[...]          # (Cout, 1)  -- broadcasts over lanes

    if use_vpu:
        # Tiny channel counts: a handful of broadcast FMAs on the VPU, lane-dense,
        # no MXU push/pop latency for a <1%-utilized matmul.
        acc = w[:, 0:1] * x[0:1, :]                       # (Cout, TM)
        for c in range(1, cin):
            acc = acc + w[:, c:c + 1] * x[c:c + 1, :]
    else:
        acc = jnp.dot(w, x, preferred_element_type=jnp.float32)

    o_ref[0] = (acc + b).astype(o_ref.dtype)


def conv_projection(x_nchw, weight, bias, stride):
    """1x1 strided conv, matching torch.nn.Conv2d(Cin, Cout, kernel_size=1, stride).

    x_nchw : (N, Cin, H, W) float32
    weight : (Cout, Cin, 1, 1) float32   (PyTorch conv weight layout)
    bias   : (Cout,) float32
    """
    N, Cin, H, W = x_nchw.shape
    Cout = weight.shape[0]

    # Strided spatial subsample (what a 1x1 conv with stride does). Only wrapper-side
    # HBM pass; skipped when stride == 1. Data stays channels-first (NCHW), so no
    # transpose is needed before or after the kernel.
    xs = x_nchw if stride == 1 else x_nchw[:, :, ::stride, ::stride]
    Ho, Wo = xs.shape[2], xs.shape[3]
    P = Ho * Wo

    x_cm = xs.reshape(N, Cin, P)            # (N, Cin, P)   contiguous reshape (free)
    w_mat = weight[:, :, 0, 0]              # (Cout, Cin)
    b_mat = bias.reshape(Cout, 1)           # (Cout, 1)

    # ---- pixel-axis tile size --------------------------------------------------
    # Block last dim must be a multiple of 128 (or the full axis). Target 512-2048
    # pixels per tile, bounded by a small VMEM budget (double-buffered in+out tiles)
    # so the same choice fits v7x's 64 MiB VMEM as well as v5e/v6e's 128 MiB.
    bytes_per_pixel = (Cin + Cout) * 4                         # f32 input + output
    budget = 8 * 1024 * 1024                                   # per live buffer pair
    tm_cap = max(128, min(2048, (budget // (2 * bytes_per_pixel)) // 128 * 128))
    TM = P if P <= tm_cap else tm_cap
    num_tiles = pl.cdiv(P, TM)

    tile_bytes = 2 * bytes_per_pixel * TM                      # double-buffered in+out
    vmem_limit = int(min(32 * 1024 * 1024, max(16 * 1024 * 1024, 4 * tile_bytes)))

    use_vpu = (Cin * Cout) <= 512          # small-channel path: VPU FMAs instead of MXU

    kernel = functools.partial(_conv1x1_kernel, cin=Cin, cout=Cout, use_vpu=use_vpu)

    out_cm = pl.pallas_call(
        kernel,
        out_shape=jax.ShapeDtypeStruct((N, Cout, P), jnp.float32),
        grid=(N, num_tiles),
        in_specs=[
            pl.BlockSpec((1, Cin, TM), lambda b, i: (b, 0, i)),   # activations
            pl.BlockSpec((Cout, Cin), lambda b, i: (0, 0)),       # weights (resident)
            pl.BlockSpec((Cout, 1), lambda b, i: (0, 0)),         # bias    (resident)
        ],
        out_specs=pl.BlockSpec((1, Cout, TM), lambda b, i: (b, 0, i)),
        compiler_params=pltpu.CompilerParams(
            dimension_semantics=("parallel", "parallel"),
            vmem_limit_bytes=vmem_limit,
        ),
    )(x_cm, w_mat, b_mat)

    # Already channels-first: (N, Cout, P) -> (N, Cout, Ho, Wo) is a free reshape.
    return out_cm.reshape(N, Cout, Ho, Wo)


if __name__ == "__main__":
    # Small deterministic example consistent with the module:
    #   channels_in=4, num_filters=8, stride=2, input (2, 4, 16, 16)
    key = jax.random.PRNGKey(0)
    k_x, k_w, k_b = jax.random.split(key, 3)

    N, Cin, H, W = 2, 4, 16, 16
    Cout, stride = 8, 2

    x = jax.random.normal(k_x, (N, Cin, H, W), dtype=jnp.float32)
    weight = jax.random.normal(k_w, (Cout, Cin, 1, 1), dtype=jnp.float32) * 0.1
    bias = jax.random.normal(k_b, (Cout,), dtype=jnp.float32) * 0.1

    out = conv_projection(x, weight, bias, stride)
    out = jax.block_until_ready(out)

    # Reference check (plain JAX einsum of the strided 1x1 conv).
    xs = x[:, :, ::stride, ::stride]
    ref = jnp.einsum("ncij,oc->noij", xs, weight[:, :, 0, 0]) + bias[None, :, None, None]
    assert out.shape == (N, Cout, H // stride, W // stride)
    assert jnp.allclose(out, ref, atol=1e-5, rtol=1e-5)

    print("KERNEL_OK")
</pallas_src>

<mosaic_0001>
module attributes {stable_mosaic.version = 11 : i64} {
  func.func @_conv1x1_kernel(%arg0: i32, %arg1: i32, %arg2: memref<1x4x64xf32, #tpu.memory_space<vmem>>, %arg3: memref<8x4xf32, #tpu.memory_space<vmem>>, %arg4: memref<8x1xf32, #tpu.memory_space<vmem>>, %arg5: memref<1x8x64xf32, #tpu.memory_space<vmem>>) attributes {dimension_semantics = [#tpu.dimension_semantics<parallel>, #tpu.dimension_semantics<parallel>], iteration_bounds = array<i64: 2, 1>, scalar_prefetch = 0 : i64, scratch_operands = 0 : i64, tpu.core_type = #tpu.core_type<tc>, window_params = [{transform_indices = @transform_0, window_bounds = array<i64: 1, 4, 64>}, {pipeline_mode = #tpu.pipeline_mode<synchronous>, transform_indices = @transform_1, window_bounds = array<i64: 8, 4>}, {pipeline_mode = #tpu.pipeline_mode<synchronous>, transform_indices = @transform_2, window_bounds = array<i64: 8, 1>}, {transform_indices = @transform_3, window_bounds = array<i64: 1, 8, 64>}]} {
    %c0 = arith.constant 0 : index
    %c0_0 = arith.constant 0 : index
    %c0_1 = arith.constant 0 : index
    %0 = vector.load %arg2[%c0, %c0_0, %c0_1] : memref<1x4x64xf32, #tpu.memory_space<vmem>>, vector<1x4x64xf32>
    %1 = vector.shape_cast %0 : vector<1x4x64xf32> to vector<4x64xf32>
    %c0_2 = arith.constant 0 : index
    %c0_3 = arith.constant 0 : index
    %2 = vector.load %arg3[%c0_2, %c0_3] : memref<8x4xf32, #tpu.memory_space<vmem>>, vector<8x4xf32>
    %c0_4 = arith.constant 0 : index
    %c0_5 = arith.constant 0 : index
    %3 = vector.load %arg4[%c0_4, %c0_5] : memref<8x1xf32, #tpu.memory_space<vmem>>, vector<8x1xf32>
    %4 = vector.extract_strided_slice %2 {offsets = [0, 0], sizes = [8, 1], strides = [1, 1]} : vector<8x4xf32> to vector<8x1xf32>
    %5 = vector.extract_strided_slice %1 {offsets = [0, 0], sizes = [1, 64], strides = [1, 1]} : vector<4x64xf32> to vector<1x64xf32>
    %6 = vector.broadcast %4 : vector<8x1xf32> to vector<8x64xf32>
    %7 = vector.broadcast %5 : vector<1x64xf32> to vector<8x64xf32>
    %8 = arith.mulf %6, %7 : vector<8x64xf32>
    %9 = vector.extract_strided_slice %2 {offsets = [0, 1], sizes = [8, 1], strides = [1, 1]} : vector<8x4xf32> to vector<8x1xf32>
    %10 = vector.extract_strided_slice %1 {offsets = [1, 0], sizes = [1, 64], strides = [1, 1]} : vector<4x64xf32> to vector<1x64xf32>
    %11 = vector.broadcast %9 : vector<8x1xf32> to vector<8x64xf32>
    %12 = vector.broadcast %10 : vector<1x64xf32> to vector<8x64xf32>
    %13 = arith.mulf %11, %12 : vector<8x64xf32>
    %14 = arith.addf %8, %13 : vector<8x64xf32>
    %15 = vector.extract_strided_slice %2 {offsets = [0, 2], sizes = [8, 1], strides = [1, 1]} : vector<8x4xf32> to vector<8x1xf32>
    %16 = vector.extract_strided_slice %1 {offsets = [2, 0], sizes = [1, 64], strides = [1, 1]} : vector<4x64xf32> to vector<1x64xf32>
    %17 = vector.broadcast %15 : vector<8x1xf32> to vector<8x64xf32>
    %18 = vector.broadcast %16 : vector<1x64xf32> to vector<8x64xf32>
    %19 = arith.mulf %17, %18 : vector<8x64xf32>
    %20 = arith.addf %14, %19 : vector<8x64xf32>
    %21 = vector.extract_strided_slice %2 {offsets = [0, 3], sizes = [8, 1], strides = [1, 1]} : vector<8x4xf32> to vector<8x1xf32>
    %22 = vector.extract_strided_slice %1 {offsets = [3, 0], sizes = [1, 64], strides = [1, 1]} : vector<4x64xf32> to vector<1x64xf32>
    %23 = vector.broadcast %21 : vector<8x1xf32> to vector<8x64xf32>
    %24 = vector.broadcast %22 : vector<1x64xf32> to vector<8x64xf32>
    %25 = arith.mulf %23, %24 : vector<8x64xf32>
    %26 = arith.addf %20, %25 : vector<8x64xf32>
    %27 = vector.broadcast %3 : vector<8x1xf32> to vector<8x64xf32>
    %28 = arith.addf %26, %27 : vector<8x64xf32>
    %c0_6 = arith.constant 0 : index
    %c0_7 = arith.constant 0 : index
    %c0_8 = arith.constant 0 : index
    %29 = vector.load %arg5[%c0_6, %c0_7, %c0_8] : memref<1x8x64xf32, #tpu.memory_space<vmem>>, vector<1x8x64xf32>
    %30 = vector.shape_cast %29 : vector<1x8x64xf32> to vector<8x64xf32>
    %31 = vector.shape_cast %28 : vector<8x64xf32> to vector<1x8x64xf32>
    tpu.vector_store %arg5[%c0_6, %c0_7, %c0_8], %31 {strides = array<i32>} : memref<1x8x64xf32, #tpu.memory_space<vmem>>, vector<1x8x64xf32>,
    return
  }
  func.func @transform_0(%arg0: i32, %arg1: i32) -> (i32, i32, i32) {
    %c0_i32 = arith.constant 0 : i32
    %c0_i32_0 = arith.constant 0 : i32
    return %arg0, %c0_i32, %arg1 : i32, i32, i32
  }
  func.func @transform_1(%arg0: i32, %arg1: i32) -> (i32, i32) {
    %c0_i32 = arith.constant 0 : i32
    %c0_i32_0 = arith.constant 0 : i32
    %c0_i32_1 = arith.constant 0 : i32
    return %c0_i32, %c0_i32_0 : i32, i32
  }
  func.func @transform_2(%arg0: i32, %arg1: i32) -> (i32, i32) {
    %c0_i32 = arith.constant 0 : i32
    %c0_i32_0 = arith.constant 0 : i32
    %c0_i32_1 = arith.constant 0 : i32
    return %c0_i32, %c0_i32_0 : i32, i32
  }
  func.func @transform_3(%arg0: i32, %arg1: i32) -> (i32, i32, i32) {
    %c0_i32 = arith.constant 0 : i32
    %c0_i32_0 = arith.constant 0 : i32
    return %arg0, %c0_i32, %arg1 : i32, i32, i32
  }
}

</mosaic_0001>

<llo_original>
// kernel: tpu_custom_call.1
$region0: #{tpu_custom_call.1}
  #allocation0 [shape = 'u32[]', space=smem, size = 0x4, offset = 0x4, fixed_abs, tag = 'smem constant byte address 0x4 - core index']
  #allocation1 [shape = 'u32[144,128]{1,0:T(1,128)}', space=vmem, size = 0x12000, scoped, tag = 'internal scratch']
  %s0 = inlined_call_operand.vmem [shape: f32[2,4,64], index: 0, kind: input, shape index: {}]
  %s1 = inlined_call_operand.vmem [shape: f32[8,4], index: 1, kind: input, shape index: {}]
  %s2 = inlined_call_operand.vmem [shape: f32[8,1], index: 2, kind: input, shape index: {}]
  %s3 = inlined_call_operand.hbm [shape: f32[2,8,64], index: 3, kind: output, shape index: {}]
  %s4 = sld [smem:[#allocation0]]
  $region45: #{tpu_custom_call.1} parent=0
    _
  %s6 = ssub.s32 1, %s4
  %s7 = scalar_select 0, %s6, %s4
  $region1: #{tpu_custom_call.1} parent=0
    #allocation2 [shape = 'u8[8192]{0}', space=vmem, size = 0x2000, scoped, tag = 'output window, operand 0']
    #allocation3 [shape = 's32[2]{0}', space=sflag, size = 0x8, scoped, tag = 'scoped memory for tpu_custom_call.1']
    %8 = vsyncpa [#allocation3], 0
    %s9 = scalar_lea.sflag [#allocation3], 1
    %10 = vsyncpa %s9, 0
    loop: start=0, step=1, limit=4
    $region2: #{tpu_custom_call.1} parent=1 // loop_pre_header
      _
    $region3: #{tpu_custom_call.1} parent=1 // loop_header
      %s12 = sphi 0, %s16
      %p13 = scmp.ge.s32.totalorder %s12, 4
      %s19 = sphi 0, %s31
      %s20 = sphi 0, %s27
      %s21 = sphi 0, %s19
      %s22 = sphi 0, %s20
      %s23 = sphi 0, %s21
      %s24 = sphi 0, %s22
      %s36 = sphi 0, %s38
      %s39 = sphi 0, %s36
      %s40 = sphi 0, %s39
      %s56 = sphi 0, %s40
      %s60 = sphi 0, %s60
      %s62 = sphi 0, %s60
      %s63 = sphi 0, %s62
      %s77 = sphi 0, %s63
      %s81 = sphi 0, %s81
      %s83 = sphi 0, %s81
      %s84 = sphi 0, %s83
      %s98 = sphi 0, %s84
      %s106 = sphi 0, %s108
      %s109 = sphi 0, %s106
      %s110 = sphi 0, %s109
      %s126 = sphi 0, %s110
    $region4: #{tpu_custom_call.1} parent=1 // loop_header_branch
      %15 = sbr.rel (%p13) target = $region8
    $region5: #{tpu_custom_call.1} parent=1 // loop_body
      %s17 = ssub.s32 %s12, 1
      %s18 = ssub.s32 %s12, 2
      %s25 = sadd.s32 1, %s20
      %p26 = scmp.ge.s32.totalorder %s25, 1
      %s27 = scalar_select %p26, 0, %s25
      %s28 = sadd.s32 1, %s19
      %s29 = scalar_select %p26, %s28, %s19
      %p30 = scmp.ge.s32.totalorder %s29, 2
      %s31 = scalar_select %p30, 0, %s29
      %s32 = ssub.s32 %s19, %s31
      %s33 = ssub.s32 %s20, %s27
      %s34 = sor.u32 %s32, %s33
      %p35 = scmp.eq.s32.totalorder %s34, 0
      %s37 = sadd.s32 %s36, 1
      %s38 = scalar_select %p35, %s36, %s37
      %p41 = pneg %p35
      %p42 = scmp.eq.s32.totalorder %s12, 1
      %p43 = por %p41, %p42
      %p44 = scmp.ne.s32.totalorder %s36, %s39
      %p45 = scmp.eq.s32.totalorder %s12, 0
      %p46 = por %p44, %p45
      %p47 = scmp.ne.s32.totalorder %s36, %s39
      %p48 = scmp.eq.s32.totalorder %s17, 1
      %p49 = por %p47, %p48
      %p50 = scmp.ne.s32.totalorder %s39, %s40
      %p51 = scmp.eq.s32.totalorder %s17, 0
      %p52 = por %p50, %p51
      %p53 = scmp.ne.s32.totalorder %s39, %s40
      %p54 = scmp.eq.s32.totalorder %s18, 1
      %p55 = por %p53, %p54
      %p57 = scmp.ne.s32.totalorder %s40, %s56
      %p58 = scmp.eq.s32.totalorder %s18, 0
      %p59 = por %p57, %p58
      %s61 = sadd.s32 %s60, 1
      %p64 = scmp.eq.s32.totalorder %s12, 1
      %p65 = scmp.ne.s32.totalorder %s60, %s62
      %p66 = scmp.eq.s32.totalorder %s12, 0
      %p67 = por %p65, %p66
      %p68 = scmp.ne.s32.totalorder %s60, %s62
      %p69 = scmp.eq.s32.totalorder %s17, 1
      %p70 = por %p68, %p69
      %p71 = scmp.ne.s32.totalorder %s62, %s63
      %p72 = scmp.eq.s32.totalorder %s17, 0
      %p73 = por %p71, %p72
      %p74 = scmp.ne.s32.totalorder %s62, %s63
      %p75 = scmp.eq.s32.totalorder %s18, 1
      %p76 = por %p74, %p75
      %p78 = scmp.ne.s32.totalorder %s63, %s77
      %p79 = scmp.eq.s32.totalorder %s18, 0
      %p80 = por %p78, %p79
      %s82 = sadd.s32 %s81, 1
      %p85 = scmp.eq.s32.totalorder %s12, 1
      %p86 = scmp.ne.s32.totalorder %s81, %s83
      %p87 = scmp.eq.s32.totalorder %s12, 0
      %p88 = por %p86, %p87
      %p89 = scmp.ne.s32.totalorder %s81, %s83
      %p90 = scmp.eq.s32.totalorder %s17, 1
      %p91 = por %p89, %p90
      %p92 = scmp.ne.s32.totalorder %s83, %s84
      %p93 = scmp.eq.s32.totalorder %s17, 0
      %p94 = por %p92, %p93
      %p95 = scmp.ne.s32.totalorder %s83, %s84
      %p96 = scmp.eq.s32.totalorder %s18, 1
      %p97 = por %p95, %p96
      %p99 = scmp.ne.s32.totalorder %s84, %s98
      %p100 = scmp.eq.s32.totalorder %s18, 0
      %p101 = por %p99, %p100
      %s102 = ssub.s32 %s19, %s31
      %s103 = ssub.s32 %s20, %s27
      %s104 = sor.u32 %s102, %s103
      %p105 = scmp.eq.s32.totalorder %s104, 0
      %s107 = sadd.s32 %s106, 1
      %s108 = scalar_select %p105, %s106, %s107
      %p111 = pneg %p105
      %p112 = scmp.eq.s32.totalorder %s12, 1
      %p113 = por %p111, %p112
      %p114 = scmp.ne.s32.totalorder %s106, %s109
      %p115 = scmp.eq.s32.totalorder %s12, 0
      %p116 = por %p114, %p115
      %p117 = scmp.ne.s32.totalorder %s106, %s109
      %p118 = scmp.eq.s32.totalorder %s17, 1
      %p119 = por %p117, %p118
      %p120 = scmp.ne.s32.totalorder %s109, %s110
      %p121 = scmp.eq.s32.totalorder %s17, 0
      %p122 = por %p120, %p121
      %p123 = scmp.ne.s32.totalorder %s109, %s110
      %p124 = scmp.eq.s32.totalorder %s18, 1
      %p125 = por %p123, %p124
      %p127 = scmp.ne.s32.totalorder %s110, %s126
      %p128 = scmp.eq.s32.totalorder %s18, 0
      %p129 = por %p127, %p128
      %p130 = scmp.le.s32.totalorder 1, %s12
      %p131 = scmp.lt.s32.totalorder %s12, 3
      %p132 = pnand %p130, %p131
      %p133 = pneg %p132
      // Predicated region
      $region9: #{tpu_custom_call.1} parent=5 // pred_check
        _
      $region10: #{tpu_custom_call.1} parent=5 // pred_check_branch
        %135 = sbr.rel (%p132) target = $region12
      $region11: #{tpu_custom_call.1} parent=5 // pred_region
        %s136 = ssub.s32 %s12, 1
        // Predicated region
        $region13: #{tpu_custom_call.1} parent=11 // pred_check
          %p137 = pneg %p73
        $region14: #{tpu_custom_call.1} parent=11 // pred_check_branch
          %139 = sbr.rel (%p137) target = $region16
        $region15: #{tpu_custom_call.1} parent=11 // pred_region
          _
        $region16: #{tpu_custom_call.1} parent=11 // pred_fallthru
          _
        // Predicated region
        $region17: #{tpu_custom_call.1} parent=11 // pred_check
          %p140 = pneg %p94
        $region18: #{tpu_custom_call.1} parent=11 // pred_check_branch
          %142 = sbr.rel (%p140) target = $region20
        $region19: #{tpu_custom_call.1} parent=11 // pred_region
          _
        $region20: #{tpu_custom_call.1} parent=11 // pred_fallthru
          _
      $region12: #{tpu_custom_call.1} parent=5 // pred_fallthru
        _
      %p143 = scmp.lt.s32.totalorder %s12, 2
      // Predicated region
      $region21: #{tpu_custom_call.1} parent=5 // pred_check
        %p144 = pneg %p143
      $region22: #{tpu_custom_call.1} parent=5 // pred_check_branch
        %146 = sbr.rel (%p144) target = $region24
      $region23: #{tpu_custom_call.1} parent=5 // pred_region
        // Predicated region
        $region25: #{tpu_custom_call.1} parent=23 // pred_check
          %p147 = pneg %p46
        $region26: #{tpu_custom_call.1} parent=23 // pred_check_branch
          %149 = sbr.rel (%p147) target = $region28
        $region27: #{tpu_custom_call.1} parent=23 // pred_region
          %p150 = scmp.lt.s32.totalorder %s19, 1
          %s151 = scalar_select %p150, %s19, 1
          %p152 = scmp.lt.s32.totalorder %s20, 0
          %s153 = scalar_select %p152, %s20, 0
          %s154 = sadd.s32 %s153, %s151
          %s155 = smul.addr %s154, 4
          %s156 = scalar_lea.vmem %s0, %s155
        $region28: #{tpu_custom_call.1} parent=23 // pred_fallthru
          _
      $region24: #{tpu_custom_call.1} parent=5 // pred_fallthru
        _
      %p157 = scmp.le.s32.totalorder 1, %s12
      %p158 = scmp.lt.s32.totalorder %s12, 3
      %p159 = pnand %p157, %p158
      %p160 = pneg %p159
      // Predicated region
      $region29: #{tpu_custom_call.1} parent=5 // pred_check
        _
      $region30: #{tpu_custom_call.1} parent=5 // pred_check_branch
        %162 = sbr.rel (%p159) target = $region32
      $region31: #{tpu_custom_call.1} parent=5 // pred_region
        %s163 = ssub.s32 %s12, 1
        %p164 = scmp.lt.s32.totalorder %s21, 1
        %s165 = scalar_select %p164, %s21, 1
        %p166 = scmp.lt.s32.totalorder %s22, 0
        %s167 = scalar_select %p166, %s22, 0
        %s168 = sadd.s32 %s167, %s165
        %s169 = smul.addr %s168, 4
        %s170 = scalar_lea.vmem %s0, %s169
        %p171 = pneg %p52
        %p172 = pneg %p49
        %p173 = pneg %p73
        %p174 = pneg %p70
        %p175 = pneg %p94
        %p176 = pneg %p91
        %p177 = pneg %p122
        %p178 = pneg %p119
        %s179 = sand.u32 %s109, 1
        %s180 = scalar_lea.sflag [#allocation3], %s179
        %s181 = sand.u32 %s109, 1
        %s182 = smul.addr %s181, 8
        %s183 = scalar_lea.vmem [#allocation2], %s182
        %p184 = scmp.lt.s32.totalorder %s21, 1
        %s185 = scalar_select %p184, %s21, 1
        %p186 = scmp.lt.s32.totalorder %s22, 0
        %s187 = scalar_select %p186, %s22, 0
        %s188 = sadd.s32 %s187, %s185
        %s189 = smul.addr %s188, 4
        %s190 = scalar_lea.vmem %s0, %s189
        %v191 = vld [vmem:[%s190] sm:$0xf]
        %v192 = vld [vmem:[%s1] sm:$0xff]
        %v193 = vld [vmem:[%s2] sm:$0xff]
        %195 = vset.pattern.permute.xlu0 0
        %196 = vperm.xlu0 %195, %v192
        %v197 = vpop.permute.xlu0 %196
        %v199 = vlaneseq
        %v200 = vshrl.u32 %v199, 7
        %v201 = vsub.s32 0, %v200
        %v202 = vrot.slane %v191, %v201
        %v203 = vmul.f32 %v197, %v202
        %204 = vset.pattern.permute.xlu0 1
        %205 = vperm.xlu0 %204, %v192
        %v206 = vpop.permute.xlu0 %205
        %v208 = vlaneseq
        %v209 = vshrl.u32 %v208, 7
        %v210 = vsub.s32 1, %v209
        %v211 = vrot.slane %v191, %v210
        %v212 = vmul.f32 %v206, %v211
        %v213 = vadd.f32 %v203, %v212
        %214 = vset.pattern.permute.xlu0 2
        %215 = vperm.xlu0 %214, %v192
        %v216 = vpop.permute.xlu0 %215
        %v218 = vlaneseq
        %v219 = vshrl.u32 %v218, 7
        %v220 = vsub.s32 2, %v219
        %v221 = vrot.slane %v191, %v220
        %v222 = vmul.f32 %v216, %v221
        %v223 = vadd.f32 %v213, %v222
        %224 = vset.pattern.permute.xlu0 3
        %225 = vperm.xlu0 %224, %v192
        %v226 = vpop.permute.xlu0 %225
        %v228 = vlaneseq
        %v229 = vshrl.u32 %v228, 7
        %v230 = vsub.s32 3, %v229
        %v231 = vrot.slane %v191, %v230
        %v232 = vmul.f32 %v226, %v231
        %v233 = vadd.f32 %v223, %v232
        %235 = vset.pattern.permute.xlu0 0
        %236 = vperm.xlu0 %235, %v193
        %v237 = vpop.permute.xlu0 %236
        %v239 = vadd.f32 %v233, %v237
        %vm240 = vcmask 523264
        %241 = vst.msk [vmem:[%s183] sm:$0xff] %vm240, %v239
        %s242 = sand.u32 %s109, 1
        %s243 = scalar_lea.sflag [#allocation3], %s242
        %s244 = sand.u32 %s109, 1
        %s245 = smul.addr %s244, 8
        %s246 = scalar_lea.vmem [#allocation2], %s245
        // Predicated region
        $region33: #{tpu_custom_call.1} parent=31 // pred_check
          %p247 = pneg %p119
        $region34: #{tpu_custom_call.1} parent=31 // pred_check_branch
          %249 = sbr.rel (%p247) target = $region36
        $region35: #{tpu_custom_call.1} parent=31 // pred_region
          %s251 = ssub.s32 128, 128
          %252 = vsyncadd %s243, %s251
          %s253 = sadd.s32 %s22, %s21
          %s254 = smul.addr %s253, 128
          %s255 = scalar_lea.hbm %s3, %s254
          %s257 = sshll.u32 %s246, 4
          %s258 = int_to_ptr.vmem [resolvable:$true] %s257
          %260 = dma.vmem_to_hbm [thread:$0]  %s258, 128, %s255, %s243
        $region36: #{tpu_custom_call.1} parent=31 // pred_fallthru
          _
      $region32: #{tpu_custom_call.1} parent=5 // pred_fallthru
        _
      %p261 = scmp.le.s32.totalorder 2, %s12
      // Predicated region
      $region37: #{tpu_custom_call.1} parent=5 // pred_check
        %p262 = pneg %p261
      $region38: #{tpu_custom_call.1} parent=5 // pred_check_branch
        %264 = sbr.rel (%p262) target = $region40
      $region39: #{tpu_custom_call.1} parent=5 // pred_region
        %s265 = ssub.s32 %s12, 2
        // Predicated region
        $region41: #{tpu_custom_call.1} parent=39 // pred_check
          %p266 = pneg %p125
        $region42: #{tpu_custom_call.1} parent=39 // pred_check_branch
          %268 = sbr.rel (%p266) target = $region44
        $region43: #{tpu_custom_call.1} parent=39 // pred_region
          %s269 = sand.u32 %s110, 1
          %s270 = scalar_lea.sflag [#allocation3], %s269
          %s271 = sand.u32 %s110, 1
          %s272 = smul.addr %s271, 8
          %s273 = scalar_lea.vmem [#allocation2], %s272
          %274 = dma.done %s270, 128
        $region44: #{tpu_custom_call.1} parent=39 // pred_fallthru
          _
      $region40: #{tpu_custom_call.1} parent=5 // pred_fallthru
        _
    $region6: #{tpu_custom_call.1} parent=1 // loop_footer
      %s16 = sadd.s32 1, %s12
    $region7: #{tpu_custom_call.1} parent=1 // loop_footer_branch
      %11 = sbr.rel target = $region3
    $region8: #{tpu_custom_call.1} parent=1 // loop_exit
      _
    %275 = vsyncpa [#allocation3], 1
    %s276 = scalar_lea.sflag [#allocation3], 1
    %277 = vsyncpa %s276, 1

</llo_original>
